<compile_context>
chip_gen: v5e
topology: v5e:2x2
jax: 0.10.0
libtpu: 0.0.40
codegen_flags: <defaults>
</compile_context>

<pallas_src>
import numpy as np
import jax
import jax.numpy as jnp
from jax.experimental import pallas as pl
from jax.experimental.pallas import tpu as pltpu


# ----------------------------------------------------------------------------
# Positional-encoding table (identical to the PyTorch PositionalEncoding.__init__;
# LxmInterpreter later re-inits pe with normal(std=0.02) -- either way it is just
# data consumed by the kernels below).
# ----------------------------------------------------------------------------
def _build_pe(d_model: int, max_len: int = 200, dtype=jnp.float32) -> jnp.ndarray:
    assert d_model % 2 == 0
    position = np.arange(0, max_len, dtype=np.float32)[:, None]              # [max_len, 1]
    div_term = np.exp(np.arange(0, d_model, 2, dtype=np.float32)
                      * (-np.log(10000.0) / d_model))                         # [d_model/2]
    pe = np.zeros((1, max_len, d_model), dtype=np.float32)
    pe[0, :, 0::2] = np.sin(position * div_term)
    pe[0, :, 1::2] = np.cos(position * div_term)
    return jnp.asarray(pe, dtype=dtype)


# ----------------------------------------------------------------------------
# 1) Standalone PositionalEncoding.forward: x + pe[:, :L, :]
# ----------------------------------------------------------------------------
def _add_pe_kernel(x_ref, pe_ref, o_ref):
    # x_ref / o_ref: (NB, TLD) tile; pe_ref: (1, TLD) tile broadcast over the
    # sublane (batch-row) axis by the VPU.
    o_ref[...] = x_ref[...] + pe_ref[...]


def _choose_tiles(N: int, LD: int, itemsize: int, target_bytes: int = 2 << 20):
    """Pick (NB, TLD): block ~0.5-4 MiB, obeying the (8,128)/full-extent rule."""
    TLD = LD
    if LD % 128 == 0 and LD * itemsize > target_bytes:
        target_elems = max(128, target_bytes // itemsize)
        n128 = LD // 128
        best = 128
        for f in range(1, n128 + 1):
            if n128 % f == 0 and f * 128 <= target_elems:
                best = f * 128
        TLD = best

    tile_row_bytes = TLD * itemsize
    NB = max(1, int(target_bytes // tile_row_bytes))
    if NB >= N:
        NB = N
        # Keep >=2 parallel grid steps when the batch allows it (v7x: 2 TCs).
        if N >= 16 and TLD == LD:
            NB = max(8, (N // 2) // 8 * 8)
    else:
        NB = max(8, (NB // 8) * 8)     # sublane rule: multiple of 8 unless full extent
        if NB >= N:
            NB = N
    return NB, TLD


def positional_encoding_forward(x: jnp.ndarray, pe: jnp.ndarray) -> jnp.ndarray:
    """x: [N, L, D]; pe: [1, max_len, D].  Returns x + pe[:, :L, :] (eval-mode)."""
    N, L, D = x.shape
    max_len = pe.shape[1]
    assert L <= max_len and pe.shape[2] == D
    LD = L * D
    itemsize = jnp.dtype(x.dtype).itemsize

    # Lane-dense 2-D views (row-major flatten of (L, D) -> same element order).
    x2 = x.reshape(N, LD)

    if LD % 128 == 0 or L == max_len:
        # Block the first L*D lanes straight out of the full flattened table:
        # no per-call HBM slice materialization of pe.
        pe2 = pe.astype(x.dtype).reshape(1, max_len * D)
    else:
        # Fallback (unaligned L*D): tiny wrapper-side slice so the pe block is
        # full-extent and the BlockSpec stays legal.
        pe2 = pe[:, :L, :].astype(x.dtype).reshape(1, LD)

    NB, TLD = _choose_tiles(N, LD, itemsize)
    n_n = pl.cdiv(N, NB)
    n_ld = LD // TLD if TLD < LD else 1

    out2 = pl.pallas_call(
        _add_pe_kernel,
        out_shape=jax.ShapeDtypeStruct((N, LD), x.dtype),
        # LD-tile axis OUTER so pe's block index only changes n_ld times total;
        # batch-tile axis INNER streams x/out contiguously.
        grid=(n_ld, n_n),
        in_specs=[
            pl.BlockSpec((NB, TLD), lambda j, i: (i, j)),   # x tiles
            pl.BlockSpec((1, TLD), lambda j, i: (0, j)),    # pe: constant over batch tiles
        ],
        out_specs=pl.BlockSpec((NB, TLD), lambda j, i: (i, j)),
        compiler_params=pltpu.CompilerParams(
            dimension_semantics=("parallel", "parallel"),
        ),
    )(x2, pe2)

    return out2.reshape(N, L, D)


# ----------------------------------------------------------------------------
# 2) encoder_embed (Linear) fused with encoder_pos_embed
#    out = aud @ W + b + pe[:, :L, :]
# ----------------------------------------------------------------------------
def _encoder_embed_pos_kernel(x_ref, w_ref, b_ref, pe_ref, o_ref):
    # x_ref: (L, A); w_ref: (A, E); b_ref: (1, E); pe_ref: (L, E); o_ref: (L, E)
    y = jnp.dot(x_ref[...], w_ref[...], preferred_element_type=jnp.float32)
    y = y + b_ref[...].astype(jnp.float32) + pe_ref[...].astype(jnp.float32)
    o_ref[...] = y.astype(o_ref.dtype)


def encoder_embed_pos_forward(aud, w, b, pe):
    """aud: [N, L, A]; w: [A, E]; b: [E]; pe: [1, max_len, E]."""
    N, L, A = aud.shape
    E = w.shape[1]
    max_len = pe.shape[1]
    assert w.shape[0] == A and b.shape == (E,)
    assert L <= max_len and pe.shape[2] == E

    b2 = b.reshape(1, E).astype(aud.dtype)
    if L % 8 == 0 or L == max_len:
        pe_in = pe.astype(aud.dtype)                 # block first L rows from full table
    else:
        pe_in = pe[:, :L, :].astype(aud.dtype)       # tiny slice keeps the block legal

    return pl.pallas_call(
        _encoder_embed_pos_kernel,
        out_shape=jax.ShapeDtypeStruct((N, L, E), aud.dtype),
        grid=(N,),
        in_specs=[
            pl.BlockSpec((None, L, A), lambda n: (n, 0, 0)),   # aud row
            pl.BlockSpec((A, E), lambda n: (0, 0)),            # weight, resident
            pl.BlockSpec((1, E), lambda n: (0, 0)),            # bias, resident
            pl.BlockSpec((None, L, E), lambda n: (0, 0, 0)),   # pe, resident
        ],
        out_specs=pl.BlockSpec((None, L, E), lambda n: (n, 0, 0)),
        compiler_params=pltpu.CompilerParams(dimension_semantics=("parallel",)),
    )(aud, w.astype(aud.dtype), b2, pe_in)


# ----------------------------------------------------------------------------
# 3) decoder_embed (Embedding gather) fused with decoder_pos_embed
#    out[n, b, :] = table[lxm_idx[n, b], :] + pe[0, b, :]
# ----------------------------------------------------------------------------
def _decoder_embed_pos_kernel(idx_ref, table_ref, pe_ref, o_ref):
    # idx_ref: SMEM (N, B) int32 (scalar-prefetched); table_ref: (lxc, E) in VMEM;
    # pe_ref: (B, E); o_ref: (B, E) for the current batch row.
    n = pl.program_id(0)
    B = pe_ref.shape[0]
    for b in range(B):                       # B = train_block_num (small) -> static unroll
        row_id = idx_ref[n, b]
        o_ref[pl.ds(b, 1), :] = (table_ref[pl.ds(row_id, 1), :]
                                 + pe_ref[pl.ds(b, 1), :])


def decoder_embed_pos_forward(lxm_idx, table, pe):
    """lxm_idx: [N, B] int; table: [lxc_size, E]; pe: [1, max_len, E]."""
    N, B = lxm_idx.shape
    lxc, E = table.shape
    assert pe.shape[2] == E and B <= pe.shape[1]
    pe_dec = pe[0, :B, :].astype(table.dtype)        # (B, E) tiny slice; full-extent block

    return pl.pallas_call(
        _decoder_embed_pos_kernel,
        out_shape=jax.ShapeDtypeStruct((N, B, E), table.dtype),
        grid_spec=pltpu.PrefetchScalarGridSpec(
            num_scalar_prefetch=1,
            grid=(N,),
            in_specs=[
                pl.BlockSpec((lxc, E), lambda n, idx: (0, 0)),   # table resident in VMEM
                pl.BlockSpec((B, E), lambda n, idx: (0, 0)),     # pe rows, resident
            ],
            out_specs=pl.BlockSpec((None, B, E), lambda n, idx: (n, 0, 0)),
        ),
        compiler_params=pltpu.CompilerParams(dimension_semantics=("arbitrary",)),
    )(lxm_idx.astype(jnp.int32), table, pe_dec)


# ----------------------------------------------------------------------------
# 4) decoder_norm (LayerNorm, eps=1e-5) fused with cls_head (Linear, bias=False)
# ----------------------------------------------------------------------------
def _norm_cls_kernel(x_ref, g_ref, b_ref, w_ref, o_ref):
    x = x_ref[...].astype(jnp.float32)                    # (TM, E)
    mean = jnp.mean(x, axis=-1, keepdims=True)
    xc = x - mean
    var = jnp.mean(xc * xc, axis=-1, keepdims=True)
    xn = xc * jax.lax.rsqrt(var + 1e-5)                   # nn.LayerNorm default eps
    y = xn * g_ref[...].astype(jnp.float32) + b_ref[...].astype(jnp.float32)
    o_ref[...] = jnp.dot(y, w_ref[...].astype(jnp.float32),
                         preferred_element_type=jnp.float32).astype(o_ref.dtype)


def decoder_norm_cls_forward(x, gamma, beta, cls_weight):
    """x: [N, B, E]; gamma/beta: [E]; cls_weight: [lxc_size, E] (PyTorch Linear layout)."""
    N, B, E = x.shape
    V = cls_weight.shape[0]
    M = N * B
    x2 = x.reshape(M, E)
    w_t = jnp.transpose(cls_weight).astype(x.dtype)       # (E, V); tiny one-off transpose
    g2 = gamma.reshape(1, E).astype(x.dtype)
    b2 = beta.reshape(1, E).astype(x.dtype)
    TM = M if M <= 512 else 512                           # full extent or multiple of 8

    out2 = pl.pallas_call(
        _norm_cls_kernel,
        out_shape=jax.ShapeDtypeStruct((M, V), x.dtype),
        grid=(pl.cdiv(M, TM),),
        in_specs=[
            pl.BlockSpec((TM, E), lambda i: (i, 0)),
            pl.BlockSpec((1, E), lambda i: (0, 0)),
            pl.BlockSpec((1, E), lambda i: (0, 0)),
            pl.BlockSpec((E, V), lambda i: (0, 0)),        # cls weight resident
        ],
        out_specs=pl.BlockSpec((TM, V), lambda i: (i, 0)),
        compiler_params=pltpu.CompilerParams(dimension_semantics=("parallel",)),
    )(x2, g2, b2, w_t)
    return out2.reshape(N, B, V)


if __name__ == "__main__":
    # Small shapes consistent with LxmInterpreter.forward:
    #   aud: [N, L, aud_dim], lxm_idx: [N, B], embed_dim E, lexeme vocab LXC.
    N, L, A, E, B, LXC = 2, 8, 32, 32, 4, 48
    MAX_LEN = 200

    root = jax.random.PRNGKey(0)
    ks = jax.random.split(root, 9)
    aud = jax.random.normal(ks[0], (N, L, A), dtype=jnp.float32)
    lxm_idx = jax.random.randint(ks[1], (N, B), 0, LXC, dtype=jnp.int32)
    enc_w = 0.05 * jax.random.normal(ks[2], (A, E), dtype=jnp.float32)
    enc_b = 0.05 * jax.random.normal(ks[3], (E,), dtype=jnp.float32)
    dec_table = 0.02 * jax.random.normal(ks[4], (LXC, E), dtype=jnp.float32)
    cls_w = 0.05 * jax.random.normal(ks[5], (LXC, E), dtype=jnp.float32)
    ln_g = 1.0 + 0.1 * jax.random.normal(ks[6], (E,), dtype=jnp.float32)
    ln_b = 0.1 * jax.random.normal(ks[7], (E,), dtype=jnp.float32)
    pe = _build_pe(E, MAX_LEN)
    hi = jax.lax.Precision.HIGHEST

    # 1) Standalone PositionalEncoding (eval mode): x + pe[:, :L, :]
    x_pe = jax.random.normal(ks[8], (N, L, E), dtype=jnp.float32)
    out1 = jax.block_until_ready(positional_encoding_forward(x_pe, pe))
    assert out1.shape == (N, L, E)
    assert jnp.allclose(out1, x_pe + pe[:, :L, :], atol=1e-6, rtol=1e-6)

    # Model-like shapes to exercise the multi-block / megacore path.
    xL = jax.random.normal(jax.random.PRNGKey(1), (16, 120, 256), dtype=jnp.float32)
    peL = _build_pe(256, MAX_LEN)
    outL = jax.block_until_ready(positional_encoding_forward(xL, peL))
    assert jnp.allclose(outL, xL + peL[:, :120, :], atol=1e-6, rtol=1e-6)

    # 2) Fused encoder_embed + encoder_pos_embed
    enc_out = jax.block_until_ready(encoder_embed_pos_forward(aud, enc_w, enc_b, pe))
    enc_ref = jnp.einsum("nla,ae->nle", aud, enc_w, precision=hi) + enc_b + pe[:, :L, :]
    assert enc_out.shape == (N, L, E)
    assert jnp.allclose(enc_out, enc_ref, atol=5e-3, rtol=5e-3)

    # 3) Fused decoder_embed (gather) + decoder_pos_embed
    dec_out = jax.block_until_ready(decoder_embed_pos_forward(lxm_idx, dec_table, pe))
    dec_ref = jnp.take(dec_table, lxm_idx, axis=0) + pe[:, :B, :]
    assert dec_out.shape == (N, B, E)
    assert jnp.allclose(dec_out, dec_ref, atol=1e-6, rtol=1e-6)

    # 4) Fused decoder_norm (LayerNorm) + cls_head (Linear, bias=False)
    logits = jax.block_until_ready(decoder_norm_cls_forward(dec_ref, ln_g, ln_b, cls_w))
    mean = dec_ref.mean(-1, keepdims=True)
    var = ((dec_ref - mean) ** 2).mean(-1, keepdims=True)
    ln_ref = (dec_ref - mean) / jnp.sqrt(var + 1e-5) * ln_g + ln_b
    logits_ref = jnp.einsum("nbe,ve->nbv", ln_ref, cls_w, precision=hi)
    assert logits.shape == (N, B, LXC)
    assert jnp.allclose(logits, logits_ref, atol=5e-3, rtol=5e-3)

    print("KERNEL_OK")
</pallas_src>

<mosaic_0001>
module attributes {stable_mosaic.version = 11 : i64} {
  func.func @_add_pe_kernel(%arg0: i32, %arg1: i32, %arg2: memref<2x256xf32, #tpu.memory_space<vmem>>, %arg3: memref<1x256xf32, #tpu.memory_space<vmem>>, %arg4: memref<2x256xf32, #tpu.memory_space<vmem>>) attributes {dimension_semantics = [#tpu.dimension_semantics<parallel>, #tpu.dimension_semantics<parallel>], iteration_bounds = array<i64: 1, 1>, scalar_prefetch = 0 : i64, scratch_operands = 0 : i64, tpu.core_type = #tpu.core_type<tc>, window_params = [{transform_indices = @transform_0, window_bounds = array<i64: 2, 256>}, {transform_indices = @transform_1, window_bounds = array<i64: 1, 256>}, {transform_indices = @transform_2, window_bounds = array<i64: 2, 256>}]} {
    %c0 = arith.constant 0 : index
    %c0_0 = arith.constant 0 : index
    %0 = vector.load %arg2[%c0, %c0_0] : memref<2x256xf32, #tpu.memory_space<vmem>>, vector<2x256xf32>
    %c0_1 = arith.constant 0 : index
    %c0_2 = arith.constant 0 : index
    %1 = vector.load %arg3[%c0_1, %c0_2] : memref<1x256xf32, #tpu.memory_space<vmem>>, vector<1x256xf32>
    %2 = vector.broadcast %1 : vector<1x256xf32> to vector<2x256xf32>
    %3 = arith.addf %0, %2 : vector<2x256xf32>
    %c0_3 = arith.constant 0 : index
    %c0_4 = arith.constant 0 : index
    %4 = vector.load %arg4[%c0_3, %c0_4] : memref<2x256xf32, #tpu.memory_space<vmem>>, vector<2x256xf32>
    tpu.vector_store %arg4[%c0_3, %c0_4], %3 {strides = array<i32>} : memref<2x256xf32, #tpu.memory_space<vmem>>, vector<2x256xf32>,
    return
  }
  func.func @transform_0(%arg0: i32, %arg1: i32) -> (i32, i32) {
    %c0_i32 = arith.constant 0 : i32
    return %arg1, %arg0 : i32, i32
  }
  func.func @transform_1(%arg0: i32, %arg1: i32) -> (i32, i32) {
    %c0_i32 = arith.constant 0 : i32
    %c0_i32_0 = arith.constant 0 : i32
    return %c0_i32, %arg0 : i32, i32
  }
  func.func @transform_2(%arg0: i32, %arg1: i32) -> (i32, i32) {
    %c0_i32 = arith.constant 0 : i32
    return %arg1, %arg0 : i32, i32
  }
}

</mosaic_0001>

<llo_original>
// kernel: tpu_custom_call.1
$region0: #{tpu_custom_call.1}
  #allocation0 [shape = 'u32[]', space=smem, size = 0x4, offset = 0x4, fixed_abs, tag = 'smem constant byte address 0x4 - core index']
  #allocation1 [shape = 'u32[72,128]{1,0:T(1,128)}', space=vmem, size = 0x9000, scoped, tag = 'internal scratch']
  %s0 = inlined_call_operand.hbm [shape: f32[2,256], index: 0, kind: input, shape index: {}]
  %s1 = inlined_call_operand.hbm [shape: f32[1,6400], index: 1, kind: input, shape index: {}]
  %s2 = inlined_call_operand.hbm [shape: f32[2,256], index: 2, kind: output, shape index: {}]
  %s3 = sld [smem:[#allocation0]]
  $region26: #{tpu_custom_call.1} parent=0
    _
  %s5 = ssub.s32 1, %s3
  %s6 = scalar_select 0, %s5, %s3
  $region1: #{tpu_custom_call.1} parent=0
    #allocation2 [shape = 'u8[2048]{0}', space=vmem, size = 0x800, scoped, tag = 'input window, operand 0, single buffered']
    #allocation3 [shape = 's32[1]{0}', space=sflag, size = 0x4, scoped, tag = 'scoped memory for tpu_custom_call.1']
    #allocation4 [shape = 's32[1]{0}', space=sflag, size = 0x4, scoped, tag = 'scoped memory for tpu_custom_call.1']
    #allocation5 [shape = 'u8[1024]{0}', space=vmem, size = 0x400, scoped, tag = 'input window, operand 1, single buffered']
    #allocation6 [shape = 's32[1]{0}', space=sflag, size = 0x4, scoped, tag = 'scoped memory for tpu_custom_call.1']
    #allocation7 [shape = 'u8[2048]{0}', space=vmem, size = 0x800, scoped, tag = 'output window, operand 0, single buffered']
    %7 = vsyncpa [#allocation3], 0
    %8 = vsyncpa [#allocation6], 0
    %9 = vsyncpa [#allocation4], 0
    // Predicated region
    $region2: #{tpu_custom_call.1} parent=1 // pred_check
      _
    $region3: #{tpu_custom_call.1} parent=1 // pred_check_branch
      %11 = sbr.rel (0) target = $region5
    $region4: #{tpu_custom_call.1} parent=1 // pred_region
      %13 = vsyncadd [#allocation3], 0
      %s15 = sshll.u32 %s0, 4
      %s16 = int_to_ptr.hbm [resolvable:$true] %s15
      %s17 = sshll.u32 [#allocation2], 4
      %s18 = int_to_ptr.vmem [resolvable:$true] %s17
      %20 = dma.hbm_to_vmem [thread:$0]  %s16, 64, %s18, [#allocation3]
    $region5: #{tpu_custom_call.1} parent=1 // pred_fallthru
      _
    // Predicated region
    $region6: #{tpu_custom_call.1} parent=1 // pred_check
      _
    $region7: #{tpu_custom_call.1} parent=1 // pred_check_branch
      %22 = sbr.rel (0) target = $region9
    $region8: #{tpu_custom_call.1} parent=1 // pred_region
      %24 = vsyncadd [#allocation6], 0
      %s26 = sshll.u32 %s1, 4
      %s27 = int_to_ptr.hbm [resolvable:$true] %s26
      %s28 = sshll.u32 [#allocation5], 4
      %s29 = int_to_ptr.vmem [resolvable:$true] %s28
      %31 = dma.hbm_to_vmem [thread:$0]  %s27, 32, %s29, [#allocation6]
    $region9: #{tpu_custom_call.1} parent=1 // pred_fallthru
      _
    // Predicated region
    $region10: #{tpu_custom_call.1} parent=1 // pred_check
      _
    $region11: #{tpu_custom_call.1} parent=1 // pred_check_branch
      %33 = sbr.rel (0) target = $region13
    $region12: #{tpu_custom_call.1} parent=1 // pred_region
      %35 = dma.done [#allocation3], 64
    $region13: #{tpu_custom_call.1} parent=1 // pred_fallthru
      _
    // Predicated region
    $region14: #{tpu_custom_call.1} parent=1 // pred_check
      _
    $region15: #{tpu_custom_call.1} parent=1 // pred_check_branch
      %37 = sbr.rel (0) target = $region17
    $region16: #{tpu_custom_call.1} parent=1 // pred_region
      %39 = dma.done [#allocation6], 32
    $region17: #{tpu_custom_call.1} parent=1 // pred_fallthru
      _
    %v40 = vld [vmem:[#allocation2] sm:$0xf]
    %v41 = vld [vmem:[#allocation5] sm:$0x3]
    %v43 = vperm.slane %v41, 0
    %v44 = vperm.slane %v41, 1
    %v45 = vrot.slane %v44, 6
    %vm46 = vcmask 1041408
    %v47 = vsel %vm46, %v43, %v45
    %v49 = vadd.f32 %v40, %v47
    %50 = vst [vmem:[#allocation7] sm:$0xf] %v49
    // Predicated region
    $region18: #{tpu_custom_call.1} parent=1 // pred_check
      _
    $region19: #{tpu_custom_call.1} parent=1 // pred_check_branch
      %52 = sbr.rel (0) target = $region21
    $region20: #{tpu_custom_call.1} parent=1 // pred_region
      %54 = vsyncadd [#allocation4], 0
      %s56 = sshll.u32 [#allocation7], 4
      %s57 = int_to_ptr.vmem [resolvable:$true] %s56
      %s58 = sshll.u32 %s2, 4
      %s59 = int_to_ptr.hbm [resolvable:$true] %s58
      %61 = dma.vmem_to_hbm [thread:$0]  %s57, 64, %s59, [#allocation4]
    $region21: #{tpu_custom_call.1} parent=1 // pred_fallthru
      _
    // Predicated region
    $region22: #{tpu_custom_call.1} parent=1 // pred_check
      _
    $region23: #{tpu_custom_call.1} parent=1 // pred_check_branch
      %63 = sbr.rel (0) target = $region25
    $region24: #{tpu_custom_call.1} parent=1 // pred_region
      %65 = dma.done [#allocation4], 64
    $region25: #{tpu_custom_call.1} parent=1 // pred_fallthru
      _
    %66 = vsyncpa [#allocation3], 1
    %67 = vsyncpa [#allocation6], 1
    %68 = vsyncpa [#allocation4], 1

</llo_original>
